<compile_context>
chip_gen: v6e
topology: v6e:2x2x1
jax: 0.10.0
libtpu: 0.0.40
codegen_flags: <defaults>
</compile_context>

<pallas_src>
import math

import jax
import jax.numpy as jnp
from jax.experimental import pallas as pl
from jax.experimental.pallas import tpu as pltpu


def patch_embed_kernel(x_ref, w_ref, pe_ref, o_ref):
    # x_ref:  (TM, patch_len) f32    w_ref: (patch_len, D) f32 (resident)
    # pe_ref: (TM, D)         f32 (resident)   o_ref: (TM, D)
    y = jnp.dot(
        x_ref[...],
        w_ref[...],
        preferred_element_type=jnp.float32,
        precision=jax.lax.Precision.HIGHEST,
    )
    o_ref[...] = (y + pe_ref[...]).astype(o_ref.dtype)


def _round_up(a, b):
    return -(-a // b) * b


def _chip_config():
    """Generation-gated VMEM caps / grid-step constraints.

    v7x: 64 MiB physical VMEM per TC, dual TensorCore -> keep >= 2 grid steps
         (even count) and stay well under 64 MiB scoped VMEM.
    v5e / v6e: 128 MiB VMEM, single TensorCore -> let the tile and the scoped
         VMEM limit grow; splitting the grid only adds per-step overhead.
    """
    vmem_cap = 64 * 1024 * 1024  # conservative default if the query fails
    try:
        vmem_cap = int(getattr(pltpu.get_tpu_info(), "vmem_capacity_bytes", vmem_cap))
    except Exception:
        pass
    if vmem_cap <= 96 * 1024 * 1024:  # v7x-like (64 MiB per TC)
        return dict(vmem_budget=36 << 20, vmem_limit_cap=48 << 20,
                    min_grid_steps=2, even_steps=True)
    return dict(vmem_budget=64 << 20, vmem_limit_cap=96 << 20,
                min_grid_steps=1, even_steps=False)


def _choose_row_tile(rows, num_patches, patch_len, d_model, cfg,
                     target_rows=8192):
    """Row tile TM: multiple of lcm(P, 8) (PE alignment + sublane tiling),
    large enough to amortize the ~0.35 us/step overhead, small enough for the
    generation's VMEM budget (incl. the resident PE slab), and leaving an even
    number of >= 2 grid steps on dual-TensorCore chips."""
    base = (8 * num_patches) // math.gcd(8, num_patches)  # lcm(P, 8)
    if rows <= base:
        return rows  # single block whose dims equal the full array dims
    lane_k = _round_up(patch_len, 128)
    lane_d = _round_up(d_model, 128)
    # Double-buffered x and output rows + (conservatively double-counted)
    # resident PE rows, all f32.
    per_row = 4 * (2 * lane_k + 2 * lane_d + 2 * lane_d)
    tm = min(target_rows, max(cfg["vmem_budget"] // per_row, base), rows)
    if cfg["min_grid_steps"] > 1:
        tm = min(tm, max(rows // cfg["min_grid_steps"], base))
    tm = max((tm // base) * base, base)
    if cfg["even_steps"]:
        steps = -(-rows // tm)
        while steps > 1 and steps % 2 != 0 and tm > base:
            tm -= base
            steps = -(-rows // tm)
    return tm


def make_positional_embedding(d_model, max_len=5000):
    """Matches PositionalEmbedding.__init__ (fixed sin/cos table)."""
    assert d_model % 2 == 0, "PositionalEmbedding requires an even d_model"
    position = jnp.arange(max_len, dtype=jnp.float32)[:, None]
    div_term = jnp.exp(
        jnp.arange(0, d_model, 2, dtype=jnp.float32) * (-(math.log(10000.0) / d_model))
    )
    pe = jnp.zeros((max_len, d_model), dtype=jnp.float32)
    pe = pe.at[:, 0::2].set(jnp.sin(position * div_term))
    pe = pe.at[:, 1::2].set(jnp.cos(position * div_term))
    return pe


def patch_embedding(x, w, pe_full, patch_len, stride, padding, out_dtype=None):
    """Forward of PatchEmbedding (embed_type='fixed', dropout=eval identity).

    x:       (B, n_vars, seq_len) float32
    w:       (d_model, patch_len) nn.Linear weight (no bias)
    pe_full: (max_len, d_model)   fixed positional-embedding table
    returns  (out, n_vars) with out: (B*n_vars, num_patches, d_model)

    out_dtype: set to jnp.bfloat16 if the downstream consumer accepts bf16
    activations (halves the dominant HBM write traffic); default keeps the
    module's float32 output.
    """
    B, n_vars, L_in = x.shape
    D, w_lp = w.shape
    assert w_lp == patch_len
    out_dtype = jnp.dtype(out_dtype) if out_dtype is not None else x.dtype

    # --- glue: ReplicationPad1d((0, padding)) + unfold (plain JAX) ---
    x_pad = jnp.pad(x, ((0, 0), (0, 0), (0, padding)), mode="edge")
    L_pad = L_in + padding
    assert L_pad >= patch_len
    P = (L_pad - patch_len) // stride + 1  # num_patches

    if stride == patch_len:
        # Non-overlapping: the unfold is a free reshape (no HBM gather).
        x_patch = x_pad[:, :, : P * patch_len].reshape(B, n_vars, P, patch_len)
    else:
        # TODO(synk): overlapping patches still materialize an XLA gather in
        # HBM; could be expressed with in-kernel static strided slices of the
        # padded rows instead.
        idx = jnp.arange(P)[:, None] * stride + jnp.arange(patch_len)[None, :]
        x_patch = x_pad[:, :, idx]

    N = B * n_vars
    rows = N * P
    # f32 end-to-end: no wrapper-side cast pass, strict parity with PyTorch.
    x_flat = x_patch.reshape(rows, patch_len).astype(jnp.float32)

    wt = jnp.asarray(w, jnp.float32).T            # (patch_len, D)
    pe = pe_full[:P, :].astype(jnp.float32)       # PositionalEmbedding: pe[:, :x.size(1)]

    # --- generation-gated row tiling + resident PE slab ---
    cfg = _chip_config()
    TM = _choose_row_tile(rows, P, patch_len, D, cfg)
    # Every block starts at a row index that is a multiple of P, so the tiled
    # PE slab stays aligned in every block. Fail loudly if that ever breaks.
    assert TM % P == 0, "row tile must be a multiple of num_patches for PE alignment"
    pe_tile = jnp.tile(pe, (TM // P, 1))          # (TM, D), VMEM-resident

    lane_k = _round_up(patch_len, 128)
    lane_d = _round_up(D, 128)
    vmem_est = (2 * TM * lane_k * 4               # double-buffered x tiles
                + 2 * TM * lane_d * 4             # double-buffered out tiles
                + 2 * TM * lane_d * 4             # resident PE slab (counted x2)
                + 2 * _round_up(patch_len, 8) * lane_d * 4)  # resident W
    vmem_limit = int(min(max(int(1.5 * vmem_est), 4 << 20), cfg["vmem_limit_cap"]))

    out_flat = pl.pallas_call(
        patch_embed_kernel,
        out_shape=jax.ShapeDtypeStruct((rows, D), out_dtype),
        grid=(pl.cdiv(rows, TM),),
        in_specs=[
            pl.BlockSpec((TM, patch_len), lambda i: (i, 0)),
            pl.BlockSpec((patch_len, D), lambda i: (0, 0)),   # resident W
            pl.BlockSpec((TM, D), lambda i: (0, 0)),          # resident PE slab
        ],
        out_specs=pl.BlockSpec((TM, D), lambda i: (i, 0)),
        compiler_params=pltpu.CompilerParams(
            dimension_semantics=("parallel",),
            vmem_limit_bytes=vmem_limit,
        ),
    )(x_flat, wt, pe_tile)

    out = out_flat.reshape(N, P, D)
    # Dropout is identity in eval mode (no RNG applied here).
    return out, n_vars


if __name__ == "__main__":
    key = jax.random.PRNGKey(0)
    k_x, k_w = jax.random.split(key)

    # Module hyperparameters (small, consistent with the forward semantics).
    d_model, patch_len, stride, padding = 32, 8, 8, 8
    B, n_vars, seq_len = 2, 4, 16

    x = jax.random.normal(k_x, (B, n_vars, seq_len), dtype=jnp.float32)

    # nn.Linear(patch_len, d_model, bias=False) weight, deterministic init.
    bound = 1.0 / math.sqrt(patch_len)
    w = jax.random.uniform(
        k_w, (d_model, patch_len), minval=-bound, maxval=bound, dtype=jnp.float32
    )

    pe_full = make_positional_embedding(d_model)

    out, n_vars_out = patch_embedding(x, w, pe_full, patch_len, stride, padding)
    out = jax.block_until_ready(out)

    # Pure-JAX f32 reference (mirrors the PyTorch module semantics).
    x_pad = jnp.pad(x, ((0, 0), (0, 0), (0, padding)), mode="edge")
    P = (seq_len + padding - patch_len) // stride + 1
    idx = jnp.arange(P)[:, None] * stride + jnp.arange(patch_len)[None, :]
    x_patch_ref = x_pad[:, :, idx].reshape(B * n_vars, P, patch_len)
    ref = (
        jnp.einsum(
            "npk,dk->npd", x_patch_ref, w, precision=jax.lax.Precision.HIGHEST
        )
        + pe_full[None, :P, :]
    )

    assert out.shape == (B * n_vars, P, d_model)
    assert out.dtype == jnp.float32
    assert n_vars_out == n_vars
    assert jnp.allclose(out, ref, atol=1e-4, rtol=1e-4)

    print("KERNEL_OK")
</pallas_src>

<mosaic_0001>
module attributes {stable_mosaic.version = 11 : i64} {
  func.func @patch_embed_kernel(%arg0: i32, %arg1: memref<24x8xf32, #tpu.memory_space<vmem>>, %arg2: memref<8x32xf32, #tpu.memory_space<vmem>>, %arg3: memref<24x32xf32, #tpu.memory_space<vmem>>, %arg4: memref<24x32xf32, #tpu.memory_space<vmem>>) attributes {dimension_semantics = [#tpu.dimension_semantics<parallel>], iteration_bounds = array<i64: 1>, scalar_prefetch = 0 : i64, scratch_operands = 0 : i64, tpu.core_type = #tpu.core_type<tc>, window_params = [{transform_indices = @transform_0, window_bounds = array<i64: 24, 8>}, {pipeline_mode = #tpu.pipeline_mode<synchronous>, transform_indices = @transform_1, window_bounds = array<i64: 8, 32>}, {pipeline_mode = #tpu.pipeline_mode<synchronous>, transform_indices = @transform_2, window_bounds = array<i64: 24, 32>}, {transform_indices = @transform_3, window_bounds = array<i64: 24, 32>}]} {
    %c0 = arith.constant 0 : index
    %c0_0 = arith.constant 0 : index
    %0 = vector.load %arg1[%c0, %c0_0] : memref<24x8xf32, #tpu.memory_space<vmem>>, vector<24x8xf32>
    %c0_1 = arith.constant 0 : index
    %c0_2 = arith.constant 0 : index
    %1 = vector.load %arg2[%c0_1, %c0_2] : memref<8x32xf32, #tpu.memory_space<vmem>>, vector<8x32xf32>
    %cst = arith.constant dense<0.000000e+00> : vector<24x32xf32>
    %2 = tpu.matmul %0, %1, %cst {dimension_numbers = #tpu.dot_dimension_numbers<[1], [0], [0], [1], [0, 0, 1, 1], [], []>, precision = #tpu.contract_precision<fp32>} : vector<24x8xf32>, vector<8x32xf32>, vector<24x32xf32> -> vector<24x32xf32>
    %c0_3 = arith.constant 0 : index
    %c0_4 = arith.constant 0 : index
    %3 = vector.load %arg3[%c0_3, %c0_4] : memref<24x32xf32, #tpu.memory_space<vmem>>, vector<24x32xf32>
    %4 = arith.addf %2, %3 : vector<24x32xf32>
    %c0_5 = arith.constant 0 : index
    %c0_6 = arith.constant 0 : index
    %5 = vector.load %arg4[%c0_5, %c0_6] : memref<24x32xf32, #tpu.memory_space<vmem>>, vector<24x32xf32>
    tpu.vector_store %arg4[%c0_5, %c0_6], %4 {strides = array<i32>} : memref<24x32xf32, #tpu.memory_space<vmem>>, vector<24x32xf32>,
    return
  }
  func.func @transform_0(%arg0: i32) -> (i32, i32) {
    %c0_i32 = arith.constant 0 : i32
    %c0_i32_0 = arith.constant 0 : i32
    return %arg0, %c0_i32 : i32, i32
  }
  func.func @transform_1(%arg0: i32) -> (i32, i32) {
    %c0_i32 = arith.constant 0 : i32
    %c0_i32_0 = arith.constant 0 : i32
    %c0_i32_1 = arith.constant 0 : i32
    return %c0_i32, %c0_i32_0 : i32, i32
  }
  func.func @transform_2(%arg0: i32) -> (i32, i32) {
    %c0_i32 = arith.constant 0 : i32
    %c0_i32_0 = arith.constant 0 : i32
    %c0_i32_1 = arith.constant 0 : i32
    return %c0_i32, %c0_i32_0 : i32, i32
  }
  func.func @transform_3(%arg0: i32) -> (i32, i32) {
    %c0_i32 = arith.constant 0 : i32
    %c0_i32_0 = arith.constant 0 : i32
    return %arg0, %c0_i32 : i32, i32
  }
}

</mosaic_0001>

<llo_original>
// kernel: tpu_custom_call.1
$region0: #{tpu_custom_call.1}
  #allocation0 [shape = 'u32[]', space=smem, size = 0x4, offset = 0x4, fixed_abs, tag = 'smem constant byte address 0x4 - core index']
  #allocation1 [shape = 'u32[144,128]{1,0:T(1,128)}', space=vmem, size = 0x12000, scoped, tag = 'internal scratch']
  %s0 = inlined_call_operand.vmem [shape: f32[24,8], index: 0, kind: input, shape index: {}]
  %s1 = inlined_call_operand.vmem [shape: f32[8,32], index: 1, kind: input, shape index: {}]
  %s2 = inlined_call_operand.vmem [shape: f32[24,32], index: 2, kind: input, shape index: {}]
  %s3 = inlined_call_operand.hbm [shape: f32[24,32], index: 3, kind: output, shape index: {}]
  %s4 = sld [smem:[#allocation0]]
  $region22: #{tpu_custom_call.1} parent=0
    _
  %s6 = ssub.s32 1, %s4
  %s7 = scalar_select 0, %s6, %s4
  $region1: #{tpu_custom_call.1} parent=0
    #allocation2 [shape = 'u8[12288]{0}', space=vmem, size = 0x3000, scoped, tag = 'output window, operand 0, single buffered']
    #allocation3 [shape = 's32[1]{0}', space=sflag, size = 0x4, scoped, tag = 'scoped memory for tpu_custom_call.1']
    %8 = vsyncpa [#allocation3], 0
    // Predicated region
    $region2: #{tpu_custom_call.1} parent=1 // pred_check
      _
    $region3: #{tpu_custom_call.1} parent=1 // pred_check_branch
      %10 = sbr.rel (0) target = $region5
    $region4: #{tpu_custom_call.1} parent=1 // pred_region
      _
    $region5: #{tpu_custom_call.1} parent=1 // pred_fallthru
      _
    // Predicated region
    $region6: #{tpu_custom_call.1} parent=1 // pred_check
      _
    $region7: #{tpu_custom_call.1} parent=1 // pred_check_branch
      %12 = sbr.rel (0) target = $region9
    $region8: #{tpu_custom_call.1} parent=1 // pred_region
      _
    $region9: #{tpu_custom_call.1} parent=1 // pred_fallthru
      _
    // Predicated region
    $region10: #{tpu_custom_call.1} parent=1 // pred_check
      _
    $region11: #{tpu_custom_call.1} parent=1 // pred_check_branch
      %14 = sbr.rel (0) target = $region13
    $region12: #{tpu_custom_call.1} parent=1 // pred_region
      _
    $region13: #{tpu_custom_call.1} parent=1 // pred_fallthru
      _
    %v15 = vld [vmem:[%s0] sm:$0xff]
    %v16 = vld [vmem:[%s0 + $0x8] sm:$0xff]
    %v17 = vld [vmem:[%s0 + $0x10] sm:$0xff]
    %v18 = vld [vmem:[%s1] sm:$0xff]
    %v19 = vld [vmem:[%s2] sm:$0xff]
    %v20 = vld [vmem:[%s2 + $0x8] sm:$0xff]
    %v21 = vld [vmem:[%s2 + $0x10] sm:$0xff]
    %vm22 = vcmask 64512
    %v24 = vsel %vm22, %v15, 0
    %v27 = vsel %vm22, %v16, 0
    %v30 = vsel %vm22, %v17, 0
    %32 = vmatprep.subr.mxu0 0.0
    %33 = vmatpush1.msra.mxu0 0.0
    %34 = vmatprep.subr.mxu0 0.0
    %35 = vmatpush1.msra.mxu0 0.0
    %36 = vmatprep.subr.mxu0 0.0
    %37 = vmatpush1.msra.mxu0 0.0
    %38 = vmatprep.subr.mxu0 0.0
    %39 = vmatpush1.msra.mxu0 0.0
    %40 = vmatprep.subr.mxu0 0.0
    %41 = vmatpush1.msra.mxu0 0.0
    %42 = vmatprep.subr.mxu0 0.0
    %43 = vmatpush1.msra.mxu0 0.0
    %44 = vmatprep.subr.mxu0 0.0
    %45 = vmatpush1.msra.mxu0 0.0
    %46 = vmatprep.subr.mxu0 0.0
    %47 = vmatpush1.msra.mxu0 0.0
    %48 = vmatprep.subr.mxu0 0.0
    %49 = vmatpush1.msra.mxu0 0.0
    %50 = vmatprep.subr.mxu0 0.0
    %51 = vmatpush1.msra.mxu0 0.0
    %52 = vmatprep.subr.mxu0 0.0
    %53 = vmatpush1.msra.mxu0 0.0
    %54 = vmatprep.subr.mxu0 0.0
    %55 = vmatpush1.msra.mxu0 0.0
    %56 = vmatprep.subr.mxu0 0.0
    %57 = vmatpush1.msra.mxu0 0.0
    %58 = vmatprep.subr.mxu0 0.0
    %59 = vmatpush1.msra.mxu0 0.0
    %60 = vmatprep.subr.mxu0 0.0
    %61 = vmatpush1.msra.mxu0 0.0
    %62 = vmatprep.subr.mxu0 0.0
    %v63 = vand.u32 %v18, 4294901760
    %64 = vmatpush1.msra.mxu0 %v63
    %65 = vmatprep.subr.mxu0 0.0
    %66 = vmatpush2.msra.mxu0 0.0
    %67 = vmatprep.subr.mxu0 0.0
    %68 = vmatpush2.msra.mxu0 0.0
    %69 = vmatprep.subr.mxu0 0.0
    %70 = vmatpush2.msra.mxu0 0.0
    %71 = vmatprep.subr.mxu0 0.0
    %72 = vmatpush2.msra.mxu0 0.0
    %73 = vmatprep.subr.mxu0 0.0
    %74 = vmatpush2.msra.mxu0 0.0
    %75 = vmatprep.subr.mxu0 0.0
    %76 = vmatpush2.msra.mxu0 0.0
    %77 = vmatprep.subr.mxu0 0.0
    %78 = vmatpush2.msra.mxu0 0.0
    %79 = vmatprep.subr.mxu0 0.0
    %80 = vmatpush2.msra.mxu0 0.0
    %81 = vmatprep.subr.mxu0 0.0
    %82 = vmatpush2.msra.mxu0 0.0
    %83 = vmatprep.subr.mxu0 0.0
    %84 = vmatpush2.msra.mxu0 0.0
    %85 = vmatprep.subr.mxu0 0.0
    %86 = vmatpush2.msra.mxu0 0.0
    %87 = vmatprep.subr.mxu0 0.0
    %88 = vmatpush2.msra.mxu0 0.0
    %89 = vmatprep.subr.mxu0 0.0
    %90 = vmatpush2.msra.mxu0 0.0
    %91 = vmatprep.subr.mxu0 0.0
    %92 = vmatpush2.msra.mxu0 0.0
    %93 = vmatprep.subr.mxu0 0.0
    %94 = vmatpush2.msra.mxu0 0.0
    %95 = vmatprep.subr.mxu0 0.0
    %96 = vmatpush2.msra.mxu0 0.0
    %97 = vmatprep.mubr.f32.mxu0 0.0
    %v98 = vand.u32 %v24, 4294901760
    %v99 = vsub.f32 %v24, %v98
    %v100 = vand.u32 %v99, 4294901760
    %v101 = vsub.f32 %v99, %v100
    %v102 = vand.u32 %v101, 4294901760
    %103 = vmatmul.mubr.f32.gmra.mxu0 %v102
    %v104 = vpop.f32.mrf.mxu0
    %v105 = vadd.f32 %v19, %v104
    %v106 = vpop.f32.mrf.mxu0
    %107 = vmatprep.mubr.f32.mxu0 0.0
    %v108 = vand.u32 %v27, 4294901760
    %v109 = vsub.f32 %v27, %v108
    %v110 = vand.u32 %v109, 4294901760
    %v111 = vsub.f32 %v109, %v110
    %v112 = vand.u32 %v111, 4294901760
    %113 = vmatmul.mubr.f32.gmra.mxu0 %v112
    %v114 = vpop.f32.mrf.mxu0
    %v115 = vadd.f32 %v20, %v114
    %v116 = vpop.f32.mrf.mxu0
    %117 = vmatprep.mubr.f32.mxu0 0.0
    %v118 = vand.u32 %v30, 4294901760
    %v119 = vsub.f32 %v30, %v118
    %v120 = vand.u32 %v119, 4294901760
    %v121 = vsub.f32 %v119, %v120
    %v122 = vand.u32 %v121, 4294901760
    %123 = vmatmul.mubr.f32.gmra.mxu0 %v122
    %v124 = vpop.f32.mrf.mxu0
    %v125 = vadd.f32 %v21, %v124
    %v126 = vpop.f32.mrf.mxu0
    %127 = vdwg.mxu0
    %128 = vmatprep.subr.mxu0 0.0
    %129 = vmatpush1.msra.mxu0 0.0
    %130 = vmatprep.subr.mxu0 0.0
    %131 = vmatpush1.msra.mxu0 0.0
    %132 = vmatprep.subr.mxu0 0.0
    %133 = vmatpush1.msra.mxu0 0.0
    %134 = vmatprep.subr.mxu0 0.0
    %135 = vmatpush1.msra.mxu0 0.0
    %136 = vmatprep.subr.mxu0 0.0
    %137 = vmatpush1.msra.mxu0 0.0
    %138 = vmatprep.subr.mxu0 0.0
    %139 = vmatpush1.msra.mxu0 0.0
    %140 = vmatprep.subr.mxu0 0.0
    %141 = vmatpush1.msra.mxu0 0.0
    %142 = vmatprep.subr.mxu0 0.0
    %143 = vmatpush1.msra.mxu0 0.0
    %144 = vmatprep.subr.mxu0 0.0
    %145 = vmatpush1.msra.mxu0 0.0
    %146 = vmatprep.subr.mxu0 0.0
    %147 = vmatpush1.msra.mxu0 0.0
    %148 = vmatprep.subr.mxu0 0.0
    %149 = vmatpush1.msra.mxu0 0.0
    %150 = vmatprep.subr.mxu0 0.0
    %151 = vmatpush1.msra.mxu0 0.0
    %152 = vmatprep.subr.mxu0 0.0
    %153 = vmatpush1.msra.mxu0 0.0
    %154 = vmatprep.subr.mxu0 0.0
    %155 = vmatpush1.msra.mxu0 0.0
    %156 = vmatprep.subr.mxu0 0.0
    %157 = vmatpush1.msra.mxu0 0.0
    %158 = vmatprep.subr.mxu0 0.0
    %v159 = vand.u32 %v18, 4294901760
    %v160 = vsub.f32 %v18, %v159
    %v161 = vand.u32 %v160, 4294901760
    %v162 = vsub.f32 %v160, %v161
    %v163 = vand.u32 %v162, 4294901760
    %164 = vmatpush1.msra.mxu0 %v163
    %165 = vmatprep.subr.mxu0 0.0
    %166 = vmatpush2.msra.mxu0 0.0
    %167 = vmatprep.subr.mxu0 0.0
    %168 = vmatpush2.msra.mxu0 0.0
    %169 = vmatprep.subr.mxu0 0.0
    %170 = vmatpush2.msra.mxu0 0.0
    %171 = vmatprep.subr.mxu0 0.0
    %172 = vmatpush2.msra.mxu0 0.0
    %173 = vmatprep.subr.mxu0 0.0
    %174 = vmatpush2.msra.mxu0 0.0
    %175 = vmatprep.subr.mxu0 0.0
    %176 = vmatpush2.msra.mxu0 0.0
    %177 = vmatprep.subr.mxu0 0.0
    %178 = vmatpush2.msra.mxu0 0.0
    %179 = vmatprep.subr.mxu0 0.0
    %180 = vmatpush2.msra.mxu0 0.0
    %181 = vmatprep.subr.mxu0 0.0
    %182 = vmatpush2.msra.mxu0 0.0
    %183 = vmatprep.subr.mxu0 0.0
    %184 = vmatpush2.msra.mxu0 0.0
    %185 = vmatprep.subr.mxu0 0.0
    %186 = vmatpush2.msra.mxu0 0.0
    %187 = vmatprep.subr.mxu0 0.0
    %188 = vmatpush2.msra.mxu0 0.0
    %189 = vmatprep.subr.mxu0 0.0
    %190 = vmatpush2.msra.mxu0 0.0
    %191 = vmatprep.subr.mxu0 0.0
    %192 = vmatpush2.msra.mxu0 0.0
    %193 = vmatprep.subr.mxu0 0.0
    %194 = vmatpush2.msra.mxu0 0.0
    %195 = vmatprep.subr.mxu0 0.0
    %196 = vmatpush2.msra.mxu0 0.0
    %197 = vmatprep.mubr.f32.mxu0 0.0
    %v198 = vand.u32 %v24, 4294901760
    %199 = vmatmul.mubr.f32.gmra.mxu0 %v198
    %v200 = vpop.f32.mrf.mxu0
    %v201 = vadd.f32 %v105, %v200
    %v202 = vpop.f32.mrf.mxu0
    %203 = vmatprep.mubr.f32.mxu0 0.0
    %v204 = vand.u32 %v27, 4294901760
    %205 = vmatmul.mubr.f32.gmra.mxu0 %v204
    %v206 = vpop.f32.mrf.mxu0
    %v207 = vadd.f32 %v115, %v206
    %v208 = vpop.f32.mrf.mxu0
    %209 = vmatprep.mubr.f32.mxu0 0.0
    %v210 = vand.u32 %v30, 4294901760
    %211 = vmatmul.mubr.f32.gmra.mxu0 %v210
    %v212 = vpop.f32.mrf.mxu0
    %v213 = vadd.f32 %v125, %v212
    %v214 = vpop.f32.mrf.mxu0
    %215 = vdwg.mxu0
    %216 = vmatprep.subr.mxu0 0.0
    %217 = vmatpush1.msra.mxu0 0.0
    %218 = vmatprep.subr.mxu0 0.0
    %219 = vmatpush1.msra.mxu0 0.0
    %220 = vmatprep.subr.mxu0 0.0
    %221 = vmatpush1.msra.mxu0 0.0
    %222 = vmatprep.subr.mxu0 0.0
    %223 = vmatpush1.msra.mxu0 0.0
    %224 = vmatprep.subr.mxu0 0.0
    %225 = vmatpush1.msra.mxu0 0.0
    %226 = vmatprep.subr.mxu0 0.0
    %227 = vmatpush1.msra.mxu0 0.0
    %228 = vmatprep.subr.mxu0 0.0
    %229 = vmatpush1.msra.mxu0 0.0
    %230 = vmatprep.subr.mxu0 0.0
    %231 = vmatpush1.msra.mxu0 0.0
    %232 = vmatprep.subr.mxu0 0.0
    %233 = vmatpush1.msra.mxu0 0.0
    %234 = vmatprep.subr.mxu0 0.0
    %235 = vmatpush1.msra.mxu0 0.0
    %236 = vmatprep.subr.mxu0 0.0
    %237 = vmatpush1.msra.mxu0 0.0
    %238 = vmatprep.subr.mxu0 0.0
    %239 = vmatpush1.msra.mxu0 0.0
    %240 = vmatprep.subr.mxu0 0.0
    %241 = vmatpush1.msra.mxu0 0.0
    %242 = vmatprep.subr.mxu0 0.0
    %243 = vmatpush1.msra.mxu0 0.0
    %244 = vmatprep.subr.mxu0 0.0
    %245 = vmatpush1.msra.mxu0 0.0
    %246 = vmatprep.subr.mxu0 0.0
    %v247 = vand.u32 %v18, 4294901760
    %v248 = vsub.f32 %v18, %v247
    %249 = vmatpush1.msra.mxu0 %v248
    %250 = vmatprep.subr.mxu0 0.0
    %251 = vmatpush2.msra.mxu0 0.0
    %252 = vmatprep.subr.mxu0 0.0
    %253 = vmatpush2.msra.mxu0 0.0
    %254 = vmatprep.subr.mxu0 0.0
    %255 = vmatpush2.msra.mxu0 0.0
    %256 = vmatprep.subr.mxu0 0.0
    %257 = vmatpush2.msra.mxu0 0.0
    %258 = vmatprep.subr.mxu0 0.0
    %259 = vmatpush2.msra.mxu0 0.0
    %260 = vmatprep.subr.mxu0 0.0
    %261 = vmatpush2.msra.mxu0 0.0
    %262 = vmatprep.subr.mxu0 0.0
    %263 = vmatpush2.msra.mxu0 0.0
    %264 = vmatprep.subr.mxu0 0.0
    %265 = vmatpush2.msra.mxu0 0.0
    %266 = vmatprep.subr.mxu0 0.0
    %267 = vmatpush2.msra.mxu0 0.0
    %268 = vmatprep.subr.mxu0 0.0
    %269 = vmatpush2.msra.mxu0 0.0
    %270 = vmatprep.subr.mxu0 0.0
    %271 = vmatpush2.msra.mxu0 0.0
    %272 = vmatprep.subr.mxu0 0.0
    %273 = vmatpush2.msra.mxu0 0.0
    %274 = vmatprep.subr.mxu0 0.0
    %275 = vmatpush2.msra.mxu0 0.0
    %276 = vmatprep.subr.mxu0 0.0
    %277 = vmatpush2.msra.mxu0 0.0
    %278 = vmatprep.subr.mxu0 0.0
    %279 = vmatpush2.msra.mxu0 0.0
    %280 = vmatprep.subr.mxu0 0.0
    %281 = vmatpush2.msra.mxu0 0.0
    %282 = vmatprep.mubr.f32.mxu0 0.0
    %v283 = vand.u32 %v24, 4294901760
    %v284 = vsub.f32 %v24, %v283
    %285 = vmatmul.mubr.f32.gmra.mxu0 %v284
    %v286 = vpop.f32.mrf.mxu0
    %v287 = vadd.f32 %v201, %v286
    %v288 = vpop.f32.mrf.mxu0
    %289 = vmatprep.mubr.f32.mxu0 0.0
    %v290 = vand.u32 %v27, 4294901760
    %v291 = vsub.f32 %v27, %v290
    %292 = vmatmul.mubr.f32.gmra.mxu0 %v291
    %v293 = vpop.f32.mrf.mxu0
    %v294 = vadd.f32 %v207, %v293
    %v295 = vpop.f32.mrf.mxu0
    %296 = vmatprep.mubr.f32.mxu0 0.0
    %v297 = vand.u32 %v30, 4294901760
    %v298 = vsub.f32 %v30, %v297
    %299 = vmatmul.mubr.f32.gmra.mxu0 %v298
    %v300 = vpop.f32.mrf.mxu0
    %v301 = vadd.f32 %v213, %v300
    %v302 = vpop.f32.mrf.mxu0
    %303 = vdwg.mxu0
    %304 = vmatprep.subr.mxu0 0.0
    %305 = vmatpush1.msra.mxu0 0.0
    %306 = vmatprep.subr.mxu0 0.0
    %307 = vmatpush1.msra.mxu0 0.0
    %308 = vmatprep.subr.mxu0 0.0
    %309 = vmatpush1.msra.mxu0 0.0
    %310 = vmatprep.subr.mxu0 0.0
    %311 = vmatpush1.msra.mxu0 0.0
    %312 = vmatprep.subr.mxu0 0.0
    %313 = vmatpush1.msra.mxu0 0.0
    %314 = vmatprep.subr.mxu0 0.0
    %315 = vmatpush1.msra.mxu0 0.0
    %316 = vmatprep.subr.mxu0 0.0
    %317 = vmatpush1.msra.mxu0 0.0
    %318 = vmatprep.subr.mxu0 0.0
    %319 = vmatpush1.msra.mxu0 0.0
    %320 = vmatprep.subr.mxu0 0.0
    %321 = vmatpush1.msra.mxu0 0.0
    %322 = vmatprep.subr.mxu0 0.0
    %323 = vmatpush1.msra.mxu0 0.0
    %324 = vmatprep.subr.mxu0 0.0
    %325 = vmatpush1.msra.mxu0 0.0
    %326 = vmatprep.subr.mxu0 0.0
    %327 = vmatpush1.msra.mxu0 0.0
    %328 = vmatprep.subr.mxu0 0.0
    %329 = vmatpush1.msra.mxu0 0.0
    %330 = vmatprep.subr.mxu0 0.0
    %331 = vmatpush1.msra.mxu0 0.0
    %332 = vmatprep.subr.mxu0 0.0
    %333 = vmatpush1.msra.mxu0 0.0
    %334 = vmatprep.subr.mxu0 0.0
    %v335 = vand.u32 %v18, 4294901760
    %336 = vmatpush1.msra.mxu0 %v335
    %337 = vmatprep.subr.mxu0 0.0
    %338 = vmatpush2.msra.mxu0 0.0
    %339 = vmatprep.subr.mxu0 0.0
    %340 = vmatpush2.msra.mxu0 0.0
    %341 = vmatprep.subr.mxu0 0.0
    %342 = vmatpush2.msra.mxu0 0.0
    %343 = vmatprep.subr.mxu0 0.0
    %344 = vmatpush2.msra.mxu0 0.0
    %345 = vmatprep.subr.mxu0 0.0
    %346 = vmatpush2.msra.mxu0 0.0
    %347 = vmatprep.subr.mxu0 0.0
    %348 = vmatpush2.msra.mxu0 0.0
    %349 = vmatprep.subr.mxu0 0.0
    %350 = vmatpush2.msra.mxu0 0.0
    %351 = vmatprep.subr.mxu0 0.0
    %352 = vmatpush2.msra.mxu0 0.0
    %353 = vmatprep.subr.mxu0 0.0
    %354 = vmatpush2.msra.mxu0 0.0
    %355 = vmatprep.subr.mxu0 0.0
    %356 = vmatpush2.msra.mxu0 0.0
    %357 = vmatprep.subr.mxu0 0.0
    %358 = vmatpush2.msra.mxu0 0.0
    %359 = vmatprep.subr.mxu0 0.0
    %360 = vmatpush2.msra.mxu0 0.0
    %361 = vmatprep.subr.mxu0 0.0
    %362 = vmatpush2.msra.mxu0 0.0
    %363 = vmatprep.subr.mxu0 0.0
    %364 = vmatpush2.msra.mxu0 0.0
    %365 = vmatprep.subr.mxu0 0.0
    %366 = vmatpush2.msra.mxu0 0.0
    %367 = vmatprep.subr.mxu0 0.0
    %368 = vmatpush2.msra.mxu0 0.0
    %369 = vmatprep.mubr.f32.mxu0 0.0
    %v370 = vand.u32 %v24, 4294901760
    %v371 = vsub.f32 %v24, %v370
    %v372 = vand.u32 %v371, 4294901760
    %373 = vmatmul.mubr.f32.gmra.mxu0 %v372
    %v374 = vpop.f32.mrf.mxu0
    %v375 = vadd.f32 %v287, %v374
    %v376 = vpop.f32.mrf.mxu0
    %377 = vmatprep.mubr.f32.mxu0 0.0
    %v378 = vand.u32 %v27, 4294901760
    %v379 = vsub.f32 %v27, %v378
    %v380 = vand.u32 %v379, 4294901760
    %381 = vmatmul.mubr.f32.gmra.mxu0 %v380
    %v382 = vpop.f32.mrf.mxu0
    %v383 = vadd.f32 %v294, %v382
    %v384 = vpop.f32.mrf.mxu0
    %385 = vmatprep.mubr.f32.mxu0 0.0
    %v386 = vand.u32 %v30, 4294901760
    %v387 = vsub.f32 %v30, %v386
    %v388 = vand.u32 %v387, 4294901760
    %389 = vmatmul.mubr.f32.gmra.mxu0 %v388
    %v390 = vpop.f32.mrf.mxu0
    %v391 = vadd.f32 %v301, %v390
    %v392 = vpop.f32.mrf.mxu0
    %393 = vdwg.mxu0
    %394 = vmatprep.subr.mxu0 0.0
    %395 = vmatpush1.msra.mxu0 0.0
    %396 = vmatprep.subr.mxu0 0.0
    %397 = vmatpush1.msra.mxu0 0.0
    %398 = vmatprep.subr.mxu0 0.0
    %399 = vmatpush1.msra.mxu0 0.0
    %400 = vmatprep.subr.mxu0 0.0
    %401 = vmatpush1.msra.mxu0 0.0
    %402 = vmatprep.subr.mxu0 0.0
    %403 = vmatpush1.msra.mxu0 0.0
    %404 = vmatprep.subr.mxu0 0.0
    %405 = vmatpush1.msra.mxu0 0.0
    %406 = vmatprep.subr.mxu0 0.0
    %407 = vmatpush1.msra.mxu0 0.0
    %408 = vmatprep.subr.mxu0 0.0
    %409 = vmatpush1.msra.mxu0 0.0
    %410 = vmatprep.subr.mxu0 0.0
    %411 = vmatpush1.msra.mxu0 0.0
    %412 = vmatprep.subr.mxu0 0.0
    %413 = vmatpush1.msra.mxu0 0.0
    %414 = vmatprep.subr.mxu0 0.0
    %415 = vmatpush1.msra.mxu0 0.0
    %416 = vmatprep.subr.mxu0 0.0
    %417 = vmatpush1.msra.mxu0 0.0
    %418 = vmatprep.subr.mxu0 0.0
    %419 = vmatpush1.msra.mxu0 0.0
    %420 = vmatprep.subr.mxu0 0.0
    %421 = vmatpush1.msra.mxu0 0.0
    %422 = vmatprep.subr.mxu0 0.0
    %423 = vmatpush1.msra.mxu0 0.0
    %424 = vmatprep.subr.mxu0 0.0
    %v425 = vand.u32 %v18, 4294901760
    %v426 = vsub.f32 %v18, %v425
    %v427 = vand.u32 %v426, 4294901760
    %428 = vmatpush1.msra.mxu0 %v427
    %429 = vmatprep.subr.mxu0 0.0
    %430 = vmatpush2.msra.mxu0 0.0
    %431 = vmatprep.subr.mxu0 0.0
    %432 = vmatpush2.msra.mxu0 0.0
    %433 = vmatprep.subr.mxu0 0.0
    %434 = vmatpush2.msra.mxu0 0.0
    %435 = vmatprep.subr.mxu0 0.0
    %436 = vmatpush2.msra.mxu0 0.0
    %437 = vmatprep.subr.mxu0 0.0
    %438 = vmatpush2.msra.mxu0 0.0
    %439 = vmatprep.subr.mxu0 0.0
    %440 = vmatpush2.msra.mxu0 0.0
    %441 = vmatprep.subr.mxu0 0.0
    %442 = vmatpush2.msra.mxu0 0.0
    %443 = vmatprep.subr.mxu0 0.0
    %444 = vmatpush2.msra.mxu0 0.0
    %445 = vmatprep.subr.mxu0 0.0
    %446 = vmatpush2.msra.mxu0 0.0
    %447 = vmatprep.subr.mxu0 0.0
    %448 = vmatpush2.msra.mxu0 0.0
    %449 = vmatprep.subr.mxu0 0.0
    %450 = vmatpush2.msra.mxu0 0.0
    %451 = vmatprep.subr.mxu0 0.0
    %452 = vmatpush2.msra.mxu0 0.0
    %453 = vmatprep.subr.mxu0 0.0
    %454 = vmatpush2.msra.mxu0 0.0
    %455 = vmatprep.subr.mxu0 0.0
    %456 = vmatpush2.msra.mxu0 0.0
    %457 = vmatprep.subr.mxu0 0.0
    %458 = vmatpush2.msra.mxu0 0.0
    %459 = vmatprep.subr.mxu0 0.0
    %460 = vmatpush2.msra.mxu0 0.0
    %461 = vmatprep.mubr.f32.mxu0 0.0
    %v462 = vand.u32 %v24, 4294901760
    %463 = vmatmul.mubr.f32.gmra.mxu0 %v462
    %v464 = vpop.f32.mrf.mxu0
    %v465 = vadd.f32 %v375, %v464
    %v466 = vpop.f32.mrf.mxu0
    %467 = vmatprep.mubr.f32.mxu0 0.0
    %v468 = vand.u32 %v27, 4294901760
    %469 = vmatmul.mubr.f32.gmra.mxu0 %v468
    %v470 = vpop.f32.mrf.mxu0
    %v471 = vadd.f32 %v383, %v470
    %v472 = vpop.f32.mrf.mxu0
    %473 = vmatprep.mubr.f32.mxu0 0.0
    %v474 = vand.u32 %v30, 4294901760
    %475 = vmatmul.mubr.f32.gmra.mxu0 %v474
    %v476 = vpop.f32.mrf.mxu0
    %v477 = vadd.f32 %v391, %v476
    %v478 = vpop.f32.mrf.mxu0
    %479 = vdwg.mxu0
    %480 = vmatprep.subr.mxu0 0.0
    %481 = vmatpush1.msra.mxu0 0.0
    %482 = vmatprep.subr.mxu0 0.0
    %483 = vmatpush1.msra.mxu0 0.0
    %484 = vmatprep.subr.mxu0 0.0
    %485 = vmatpush1.msra.mxu0 0.0
    %486 = vmatprep.subr.mxu0 0.0
    %487 = vmatpush1.msra.mxu0 0.0
    %488 = vmatprep.subr.mxu0 0.0
    %489 = vmatpush1.msra.mxu0 0.0
    %490 = vmatprep.subr.mxu0 0.0
    %491 = vmatpush1.msra.mxu0 0.0
    %492 = vmatprep.subr.mxu0 0.0
    %493 = vmatpush1.msra.mxu0 0.0
    %494 = vmatprep.subr.mxu0 0.0
    %495 = vmatpush1.msra.mxu0 0.0
    %496 = vmatprep.subr.mxu0 0.0
    %497 = vmatpush1.msra.mxu0 0.0
    %498 = vmatprep.subr.mxu0 0.0
    %499 = vmatpush1.msra.mxu0 0.0
    %500 = vmatprep.subr.mxu0 0.0
    %501 = vmatpush1.msra.mxu0 0.0
    %502 = vmatprep.subr.mxu0 0.0
    %503 = vmatpush1.msra.mxu0 0.0
    %504 = vmatprep.subr.mxu0 0.0
    %505 = vmatpush1.msra.mxu0 0.0
    %506 = vmatprep.subr.mxu0 0.0
    %507 = vmatpush1.msra.mxu0 0.0
    %508 = vmatprep.subr.mxu0 0.0
    %509 = vmatpush1.msra.mxu0 0.0
    %510 = vmatprep.subr.mxu0 0.0
    %v511 = vand.u32 %v18, 4294901760
    %512 = vmatpush1.msra.mxu0 %v511
    %513 = vmatprep.subr.mxu0 0.0
    %514 = vmatpush2.msra.mxu0 0.0
    %515 = vmatprep.subr.mxu0 0.0
    %516 = vmatpush2.msra.mxu0 0.0
    %517 = vmatprep.subr.mxu0 0.0
    %518 = vmatpush2.msra.mxu0 0.0
    %519 = vmatprep.subr.mxu0 0.0
    %520 = vmatpush2.msra.mxu0 0.0
    %521 = vmatprep.subr.mxu0 0.0
    %522 = vmatpush2.msra.mxu0 0.0
    %523 = vmatprep.subr.mxu0 0.0
    %524 = vmatpush2.msra.mxu0 0.0
    %525 = vmatprep.subr.mxu0 0.0
    %526 = vmatpush2.msra.mxu0 0.0
    %527 = vmatprep.subr.mxu0 0.0
    %528 = vmatpush2.msra.mxu0 0.0
    %529 = vmatprep.subr.mxu0 0.0
    %530 = vmatpush2.msra.mxu0 0.0
    %531 = vmatprep.subr.mxu0 0.0
    %532 = vmatpush2.msra.mxu0 0.0
    %533 = vmatprep.subr.mxu0 0.0
    %534 = vmatpush2.msra.mxu0 0.0
    %535 = vmatprep.subr.mxu0 0.0
    %536 = vmatpush2.msra.mxu0 0.0
    %537 = vmatprep.subr.mxu0 0.0
    %538 = vmatpush2.msra.mxu0 0.0
    %539 = vmatprep.subr.mxu0 0.0
    %540 = vmatpush2.msra.mxu0 0.0
    %541 = vmatprep.subr.mxu0 0.0
    %542 = vmatpush2.msra.mxu0 0.0
    %543 = vmatprep.subr.mxu0 0.0
    %544 = vmatpush2.msra.mxu0 0.0
    %545 = vmatprep.mubr.f32.mxu0 0.0
    %v546 = vand.u32 %v24, 4294901760
    %547 = vmatmul.mubr.f32.gmra.mxu0 %v546
    %v548 = vpop.f32.mrf.mxu0
    %v549 = vadd.f32 %v465, %v548
    %v550 = vpop.f32.mrf.mxu0
    %551 = vmatprep.mubr.f32.mxu0 0.0
    %v552 = vand.u32 %v27, 4294901760
    %553 = vmatmul.mubr.f32.gmra.mxu0 %v552
    %v554 = vpop.f32.mrf.mxu0
    %v555 = vadd.f32 %v471, %v554
    %v556 = vpop.f32.mrf.mxu0
    %557 = vmatprep.mubr.f32.mxu0 0.0
    %v558 = vand.u32 %v30, 4294901760
    %559 = vmatmul.mubr.f32.gmra.mxu0 %v558
    %v560 = vpop.f32.mrf.mxu0
    %v561 = vadd.f32 %v477, %v560
    %v562 = vpop.f32.mrf.mxu0
    %563 = vdwg.mxu0
    %vm564 = vcmask 261120
    %565 = vst.msk [vmem:[#allocation2] sm:$0xff] %vm564, %v549
    %566 = vst.msk [vmem:[#allocation2 + $0x8] sm:$0xff] %vm564, %v555
    %567 = vst.msk [vmem:[#allocation2 + $0x10] sm:$0xff] %vm564, %v561
    // Predicated region
    $region14: #{tpu_custom_call.1} parent=1 // pred_check
      _
    $region15: #{tpu_custom_call.1} parent=1 // pred_check_branch
      %569 = sbr.rel (0) target = $region17
    $region16: #{tpu_custom_call.1} parent=1 // pred_region
      %s571 = ssub.s32 384, 384
      %572 = vsyncadd [#allocation3], %s571
      %s573 = sshll.u32 [#allocation2], 4
      %s574 = int_to_ptr.vmem [resolvable:$true] %s573
      %579 = dma.vmem_to_hbm [thread:$0]  %s574, 384, %s3, [#allocation3], 128, 128, 8
    $region17: #{tpu_custom_call.1} parent=1 // pred_fallthru
      _
    // Predicated region
    $region18: #{tpu_custom_call.1} parent=1 // pred_check
      _
    $region19: #{tpu_custom_call.1} parent=1 // pred_check_branch
      %581 = sbr.rel (0) target = $region21
    $region20: #{tpu_custom_call.1} parent=1 // pred_region
      %582 = dma.done [#allocation3], 384
    $region21: #{tpu_custom_call.1} parent=1 // pred_fallthru
      _
    %583 = vsyncpa [#allocation3], 1

</llo_original>
